<compile_context>
chip_gen: v7x
topology: tpu7x:2x2x1
jax: 0.10.0
libtpu: 0.0.40
codegen_flags: <defaults>
</compile_context>

<pallas_src>
import jax
import jax.numpy as jnp
from jax import lax
from jax.experimental import pallas as pl
from jax.experimental.pallas import tpu as pltpu


_TB_CAP = 256   # batch-tile cap; sweep {128, 256} per generation when tuning.


def _round_up(x, m):
    return ((x + m - 1) // m) * m


def _cdiv(a, b):
    return -(-a // b)


def _device_kind():
    try:
        return jax.devices()[0].device_kind.lower()
    except Exception:
        return ""


def _plan_batch_tiling(B):
    """Return (TB, B_pad, grid).

    Lane-dense output blocks (1, TB) need TB % 128 == 0 whenever grid > 1;
    a single-tile case only needs a sublane multiple of 8 (block == full dim).
    """
    B8 = _round_up(B, 8)
    # v7x has 2 TensorCores: force >= 2 tiles when the batch is big enough so
    # CORE_PARALLEL can shard grid steps across both cores.
    min_tiles = 2 if ("v7" in _device_kind() and B8 >= 256) else 1
    num_tiles = max(min_tiles, _cdiv(B8, _TB_CAP))
    if num_tiles == 1:
        TB = B8
    else:
        # Balanced tiles, 128-lane aligned (minimizes zero-row padding).
        TB = _round_up(_cdiv(B, num_tiles), 128)
    return TB, TB * num_tiles, num_tiles


def _dim_semantics(grid):
    # Plain "parallel" vs "arbitrary" barely changes codegen; only CORE_PARALLEL
    # actually shards grid steps across v7x's two TensorCores.
    if grid > 1 and "v7" in _device_kind():
        return (getattr(pltpu, "CORE_PARALLEL", "parallel"),)
    return ("parallel",)


def _q_row(x, w1, b1, w2, b2, w3, b3):
    """One critic MLP on a (TB, K_pad) bf16 tile -> (1, TB) f32 q row."""
    # fc1 (+ fused concat: zero-padded K is exact) -- bf16 operands, f32 MXU acc.
    h1 = jnp.dot(x, w1, preferred_element_type=jnp.float32) + b1
    h1 = jnp.maximum(h1, 0.0)
    # fc2 + relu (256x256 bf16 matmul, f32 accumulate); the f32->bf16 cast rides
    # free VPU slots under the MXU.
    h2 = jnp.dot(h1.astype(jnp.bfloat16), w2,
                 preferred_element_type=jnp.float32) + b2
    h2 = jnp.maximum(h2, 0.0)
    # fc3 head (256 -> 1), emitted lane-dense: contract the hidden dim of the
    # f32 (1,256) w3 row against h2's hidden dim -> (1, TB).  Tiny M=1 matmul;
    # keeps the q row in lanes so the output store is a full-width vst.
    q = lax.dot_general(w3, h2, (((1,), (1,)), ((), ())),
                        preferred_element_type=jnp.float32) + b3
    return q


def soft_q_kernel(x_ref, w1_ref, b1_ref, w2_ref, b2_ref, w3_ref, b3_ref,
                  out_ref):
    out_ref[...] = _q_row(x_ref[...], w1_ref[...], b1_ref[...], w2_ref[...],
                          b2_ref[...], w3_ref[...], b3_ref[...])


def soft_q_pair_kernel(x_ref,
                       w1a, b1a, w2a, b2a, w3a, b3a,
                       w1b, b1b, w2b, b2b, w3b, b3b,
                       out_ref):
    # Fused SAC twin critics: one launch, one shared state/action tile in VMEM.
    x = x_ref[...]
    out_ref[0:1, :] = _q_row(x, w1a[...], b1a[...], w2a[...], b2a[...],
                             w3a[...], b3a[...])
    out_ref[1:2, :] = _q_row(x, w1b[...], b1b[...], w2b[...], b2b[...],
                             w3b[...], b3b[...])


def init_params(key, input_dim, hidden_dim=256):
    """torch.nn.Linear-style init; weights stored (in_features, out_features)."""
    k1, k2, k3, k4, k5, k6 = jax.random.split(key, 6)

    def linear(kw, kb, fan_in, fan_out):
        bound = 1.0 / jnp.sqrt(jnp.float32(fan_in))
        w = jax.random.uniform(kw, (fan_in, fan_out), jnp.float32, -bound, bound)
        b = jax.random.uniform(kb, (1, fan_out), jnp.float32, -bound, bound)
        return w, b

    w1, b1 = linear(k1, k2, input_dim, hidden_dim)
    w2, b2 = linear(k3, k4, hidden_dim, hidden_dim)
    w3, b3 = linear(k5, k6, hidden_dim, 1)
    return (w1, b1, w2, b2, w3, b3)


def prepare_params(params):
    """One-time conversion to kernel layout (bf16 matmul weights, padded fc1).

    Call once at init / after each optimizer step -- NOT per forward call -- so
    the forward pass runs no cast/pad XLA neighbors.
    """
    w1, b1, w2, b2, w3, b3 = params
    input_dim, hidden = w1.shape
    k_pad = _round_up(input_dim, 16)          # bf16 sublane tile: 20 -> 32
    w1p = jnp.pad(w1.astype(jnp.bfloat16), ((0, k_pad - input_dim), (0, 0)))
    return {
        "w1": w1p,                                         # (K_pad, H) bf16
        "b1": b1.reshape(1, hidden).astype(jnp.float32),   # (1, H)    f32
        "w2": w2.astype(jnp.bfloat16),                     # (H, H)    bf16
        "b2": b2.reshape(1, hidden).astype(jnp.float32),   # (1, H)    f32
        "w3": w3.reshape(1, hidden).astype(jnp.float32),   # (1, H)    f32
        "b3": b3.reshape(1, 1).astype(jnp.float32),        # (1, 1)    f32
    }


def _build_input(state, action, k_pad, b_pad):
    """concat + zero-pad + bf16 cast; fuses to one small XLA op under jit."""
    x = jnp.concatenate([state, action], axis=-1).astype(jnp.bfloat16)
    b, k = x.shape
    return jnp.pad(x, ((0, b_pad - b), (0, k_pad - k)))


def _resident(arr):
    # Full-array block with a constant index map: fetched once, stays
    # VMEM-resident across grid steps.  Double-buffer reservation for these
    # small weights (~0.26 MB) is negligible vs the 32 MiB scoped default, so
    # no pipeline_mode override is needed at this model size.
    return pl.BlockSpec(arr.shape, lambda i: (0,) * arr.ndim)


def soft_q_forward(state, action, kp):
    """state (B, obs_dim) f32, action (B, act_dim) f32 -> q (B, 1) f32."""
    B = state.shape[0]
    k_pad, hidden = kp["w1"].shape
    TB, B_pad, grid = _plan_batch_tiling(B)
    x = _build_input(state, action, k_pad, B_pad)

    flops = 2 * B_pad * (k_pad * hidden + hidden * hidden + hidden)
    bytes_accessed = (B_pad * k_pad * 2 + k_pad * hidden * 2
                      + hidden * hidden * 2 + (3 * hidden + 1) * 4 + B_pad * 4)

    out = pl.pallas_call(
        soft_q_kernel,
        out_shape=jax.ShapeDtypeStruct((1, B_pad), jnp.float32),
        grid=(grid,),
        in_specs=[
            pl.BlockSpec((TB, k_pad), lambda i: (i, 0)),
            _resident(kp["w1"]), _resident(kp["b1"]),
            _resident(kp["w2"]), _resident(kp["b2"]),
            _resident(kp["w3"]), _resident(kp["b3"]),
        ],
        out_specs=pl.BlockSpec((1, TB), lambda i: (0, i)),
        compiler_params=pltpu.CompilerParams(
            dimension_semantics=_dim_semantics(grid)),
        cost_estimate=pl.CostEstimate(
            flops=flops, transcendentals=0, bytes_accessed=bytes_accessed),
    )(x, kp["w1"], kp["b1"], kp["w2"], kp["b2"], kp["w3"], kp["b3"])

    return out[0, :B].reshape(B, 1)


def soft_q_forward_pair(state, action, kp1, kp2):
    """Fused SAC twin critics (qf1/qf2) in one pallas_call.  Returns (q1, q2)."""
    B = state.shape[0]
    k_pad, hidden = kp1["w1"].shape
    TB, B_pad, grid = _plan_batch_tiling(B)
    x = _build_input(state, action, k_pad, B_pad)

    names = ("w1", "b1", "w2", "b2", "w3", "b3")
    weights = [kp[n] for kp in (kp1, kp2) for n in names]

    flops = 4 * B_pad * (k_pad * hidden + hidden * hidden + hidden)
    bytes_accessed = (B_pad * k_pad * 2
                      + 2 * (k_pad * hidden * 2 + hidden * hidden * 2
                             + (3 * hidden + 1) * 4)
                      + 2 * B_pad * 4)

    out = pl.pallas_call(
        soft_q_pair_kernel,
        out_shape=jax.ShapeDtypeStruct((2, B_pad), jnp.float32),
        grid=(grid,),
        in_specs=[pl.BlockSpec((TB, k_pad), lambda i: (i, 0))]
                 + [_resident(w) for w in weights],
        out_specs=pl.BlockSpec((2, TB), lambda i: (0, i)),
        compiler_params=pltpu.CompilerParams(
            dimension_semantics=_dim_semantics(grid)),
        cost_estimate=pl.CostEstimate(
            flops=flops, transcendentals=0, bytes_accessed=bytes_accessed),
    )(x, *weights)

    return out[0, :B].reshape(B, 1), out[1, :B].reshape(B, 1)


# ----------------------------- references -----------------------------------

def _reference_f32(state, action, params):
    w1, b1, w2, b2, w3, b3 = params
    x = jnp.concatenate([state, action], axis=-1)
    h = jnp.maximum(x @ w1 + b1, 0.0)
    h = jnp.maximum(h @ w2 + b2, 0.0)
    return h @ w3 + b3


def _reference_bf16(state, action, params):
    """Mirrors the kernel's bf16-operand / f32-accumulate math."""
    w1, b1, w2, b2, w3, b3 = params
    x = jnp.concatenate([state, action], axis=-1).astype(jnp.bfloat16)
    h = jnp.maximum(jnp.dot(x, w1.astype(jnp.bfloat16),
                            preferred_element_type=jnp.float32) + b1, 0.0)
    h = jnp.maximum(jnp.dot(h.astype(jnp.bfloat16), w2.astype(jnp.bfloat16),
                            preferred_element_type=jnp.float32) + b2, 0.0)
    return h @ w3 + b3


if __name__ == "__main__":
    key = jax.random.PRNGKey(0)
    kw1, kw2, ks, ka, ks2, ka2 = jax.random.split(key, 6)

    batch = 2
    obs_dim = 16   # e.g. env.observation_space.shape = (16,)
    act_dim = 4    # e.g. env.action_space.shape = (4,)
    hidden_dim = 256

    params1 = init_params(kw1, obs_dim + act_dim, hidden_dim)
    params2 = init_params(kw2, obs_dim + act_dim, hidden_dim)
    kp1 = prepare_params(params1)   # one-time weight prep (bf16 cast + fc1 pad)
    kp2 = prepare_params(params2)

    fwd = jax.jit(soft_q_forward)
    fwd_pair = jax.jit(soft_q_forward_pair)

    # --- small single-tile case (grid = 1) ---
    state = jax.random.normal(ks, (batch, obs_dim), jnp.float32)
    action = jax.random.normal(ka, (batch, act_dim), jnp.float32)

    q = fwd(state, action, kp1)
    jax.block_until_ready(q)
    assert q.shape == (batch, 1)
    assert jnp.allclose(q, _reference_bf16(state, action, params1),
                        atol=2e-2, rtol=2e-2)
    assert jnp.allclose(q, _reference_f32(state, action, params1),
                        atol=5e-2, rtol=5e-2)

    # --- fused twin-critic call (one launch for qf1/qf2) ---
    q1, q2 = fwd_pair(state, action, kp1, kp2)
    jax.block_until_ready(q2)
    assert jnp.allclose(q1, q, atol=1e-4, rtol=1e-4)
    assert jnp.allclose(q2, _reference_bf16(state, action, params2),
                        atol=2e-2, rtol=2e-2)

    # --- multi-tile / padded-batch case (B not a multiple of TB, grid > 1) ---
    big_b = 300
    state_b = jax.random.normal(ks2, (big_b, obs_dim), jnp.float32)
    action_b = jax.random.normal(ka2, (big_b, act_dim), jnp.float32)
    q_b = fwd(state_b, action_b, kp1)
    jax.block_until_ready(q_b)
    assert q_b.shape == (big_b, 1)
    assert jnp.allclose(q_b, _reference_bf16(state_b, action_b, params1),
                        atol=2e-2, rtol=2e-2)
    assert jnp.allclose(q_b, _reference_f32(state_b, action_b, params1),
                        atol=5e-2, rtol=5e-2)

    print("KERNEL_OK")
</pallas_src>

<mosaic_0001>
module attributes {stable_mosaic.version = 11 : i64} {
  func.func @soft_q_kernel(%arg0: i32, %arg1: memref<8x32xbf16, #tpu.memory_space<vmem>>, %arg2: memref<32x256xbf16, #tpu.memory_space<vmem>>, %arg3: memref<1x256xf32, #tpu.memory_space<vmem>>, %arg4: memref<256x256xbf16, #tpu.memory_space<vmem>>, %arg5: memref<1x256xf32, #tpu.memory_space<vmem>>, %arg6: memref<1x256xf32, #tpu.memory_space<vmem>>, %arg7: memref<1x1xf32, #tpu.memory_space<vmem>>, %arg8: memref<1x8xf32, #tpu.memory_space<vmem>>) attributes {dimension_semantics = [#tpu.dimension_semantics<parallel>], iteration_bounds = array<i64: 1>, scalar_prefetch = 0 : i64, scratch_operands = 0 : i64, tpu.core_type = #tpu.core_type<tc>, window_params = [{transform_indices = @transform_0, window_bounds = array<i64: 8, 32>}, {pipeline_mode = #tpu.pipeline_mode<synchronous>, transform_indices = @transform_1, window_bounds = array<i64: 32, 256>}, {pipeline_mode = #tpu.pipeline_mode<synchronous>, transform_indices = @transform_2, window_bounds = array<i64: 1, 256>}, {pipeline_mode = #tpu.pipeline_mode<synchronous>, transform_indices = @transform_3, window_bounds = array<i64: 256, 256>}, {pipeline_mode = #tpu.pipeline_mode<synchronous>, transform_indices = @transform_4, window_bounds = array<i64: 1, 256>}, {pipeline_mode = #tpu.pipeline_mode<synchronous>, transform_indices = @transform_5, window_bounds = array<i64: 1, 256>}, {pipeline_mode = #tpu.pipeline_mode<synchronous>, transform_indices = @transform_6, window_bounds = array<i64: 1, 1>}, {transform_indices = @transform_7, window_bounds = array<i64: 1, 8>}]} {
    %c0 = arith.constant 0 : index
    %c0_0 = arith.constant 0 : index
    %0 = vector.load %arg1[%c0, %c0_0] : memref<8x32xbf16, #tpu.memory_space<vmem>>, vector<8x32xbf16>
    %c0_1 = arith.constant 0 : index
    %c0_2 = arith.constant 0 : index
    %1 = vector.load %arg2[%c0_1, %c0_2] : memref<32x256xbf16, #tpu.memory_space<vmem>>, vector<32x256xbf16>
    %c0_3 = arith.constant 0 : index
    %c0_4 = arith.constant 0 : index
    %2 = vector.load %arg3[%c0_3, %c0_4] : memref<1x256xf32, #tpu.memory_space<vmem>>, vector<1x256xf32>
    %c0_5 = arith.constant 0 : index
    %c0_6 = arith.constant 0 : index
    %3 = vector.load %arg4[%c0_5, %c0_6] : memref<256x256xbf16, #tpu.memory_space<vmem>>, vector<256x256xbf16>
    %c0_7 = arith.constant 0 : index
    %c0_8 = arith.constant 0 : index
    %4 = vector.load %arg5[%c0_7, %c0_8] : memref<1x256xf32, #tpu.memory_space<vmem>>, vector<1x256xf32>
    %c0_9 = arith.constant 0 : index
    %c0_10 = arith.constant 0 : index
    %5 = vector.load %arg6[%c0_9, %c0_10] : memref<1x256xf32, #tpu.memory_space<vmem>>, vector<1x256xf32>
    %c0_11 = arith.constant 0 : index
    %c0_12 = arith.constant 0 : index
    %6 = vector.load %arg7[%c0_11, %c0_12] : memref<1x1xf32, #tpu.memory_space<vmem>>, vector<1x1xf32>
    %cst = arith.constant dense<0.000000e+00> : vector<8x256xf32>
    %7 = tpu.matmul %0, %1, %cst {dimension_numbers = #tpu.dot_dimension_numbers<[1], [0], [0], [1], [0, 0, 1, 1], [], []>} : vector<8x32xbf16>, vector<32x256xbf16>, vector<8x256xf32> -> vector<8x256xf32>
    %8 = vector.broadcast %2 : vector<1x256xf32> to vector<8x256xf32>
    %9 = arith.addf %7, %8 : vector<8x256xf32>
    %cst_13 = arith.constant 0.000000e+00 : f32
    %10 = vector.broadcast %cst_13 : f32 to vector<8x256xf32>
    %11 = arith.maximumf %9, %10 : vector<8x256xf32>
    %12 = arith.truncf %11 : vector<8x256xf32> to vector<8x256xbf16>
    %cst_14 = arith.constant dense<0.000000e+00> : vector<8x256xf32>
    %13 = tpu.matmul %12, %3, %cst_14 {dimension_numbers = #tpu.dot_dimension_numbers<[1], [0], [0], [1], [0, 0, 1, 1], [], []>} : vector<8x256xbf16>, vector<256x256xbf16>, vector<8x256xf32> -> vector<8x256xf32>
    %14 = vector.broadcast %4 : vector<1x256xf32> to vector<8x256xf32>
    %15 = arith.addf %13, %14 : vector<8x256xf32>
    %cst_15 = arith.constant 0.000000e+00 : f32
    %16 = vector.broadcast %cst_15 : f32 to vector<8x256xf32>
    %17 = arith.maximumf %15, %16 : vector<8x256xf32>
    %cst_16 = arith.constant dense<0.000000e+00> : vector<1x8xf32>
    %18 = tpu.matmul %5, %17, %cst_16 {dimension_numbers = #tpu.dot_dimension_numbers<[1], [1], [0], [0], [0, 0, 1, 0], [], []>} : vector<1x256xf32>, vector<8x256xf32>, vector<1x8xf32> -> vector<1x8xf32>
    %19 = vector.broadcast %6 : vector<1x1xf32> to vector<1x8xf32>
    %20 = arith.addf %18, %19 : vector<1x8xf32>
    %c0_17 = arith.constant 0 : index
    %c0_18 = arith.constant 0 : index
    %21 = vector.load %arg8[%c0_17, %c0_18] : memref<1x8xf32, #tpu.memory_space<vmem>>, vector<1x8xf32>
    tpu.vector_store %arg8[%c0_17, %c0_18], %20 {strides = array<i32>} : memref<1x8xf32, #tpu.memory_space<vmem>>, vector<1x8xf32>,
    return
  }
  func.func @transform_0(%arg0: i32) -> (i32, i32) {
    %c0_i32 = arith.constant 0 : i32
    %c0_i32_0 = arith.constant 0 : i32
    return %arg0, %c0_i32 : i32, i32
  }
  func.func @transform_1(%arg0: i32) -> (i32, i32) {
    %c0_i32 = arith.constant 0 : i32
    %c0_i32_0 = arith.constant 0 : i32
    %c0_i32_1 = arith.constant 0 : i32
    return %c0_i32, %c0_i32_0 : i32, i32
  }
  func.func @transform_2(%arg0: i32) -> (i32, i32) {
    %c0_i32 = arith.constant 0 : i32
    %c0_i32_0 = arith.constant 0 : i32
    %c0_i32_1 = arith.constant 0 : i32
    return %c0_i32, %c0_i32_0 : i32, i32
  }
  func.func @transform_3(%arg0: i32) -> (i32, i32) {
    %c0_i32 = arith.constant 0 : i32
    %c0_i32_0 = arith.constant 0 : i32
    %c0_i32_1 = arith.constant 0 : i32
    return %c0_i32, %c0_i32_0 : i32, i32
  }
  func.func @transform_4(%arg0: i32) -> (i32, i32) {
    %c0_i32 = arith.constant 0 : i32
    %c0_i32_0 = arith.constant 0 : i32
    %c0_i32_1 = arith.constant 0 : i32
    return %c0_i32, %c0_i32_0 : i32, i32
  }
  func.func @transform_5(%arg0: i32) -> (i32, i32) {
    %c0_i32 = arith.constant 0 : i32
    %c0_i32_0 = arith.constant 0 : i32
    %c0_i32_1 = arith.constant 0 : i32
    return %c0_i32, %c0_i32_0 : i32, i32
  }
  func.func @transform_6(%arg0: i32) -> (i32, i32) {
    %c0_i32 = arith.constant 0 : i32
    %c0_i32_0 = arith.constant 0 : i32
    %c0_i32_1 = arith.constant 0 : i32
    return %c0_i32, %c0_i32_0 : i32, i32
  }
  func.func @transform_7(%arg0: i32) -> (i32, i32) {
    %c0_i32 = arith.constant 0 : i32
    %c0_i32_0 = arith.constant 0 : i32
    return %c0_i32, %arg0 : i32, i32
  }
}

</mosaic_0001>

<llo_original>
// kernel: soft_q_forward.1
$region0: #{soft_q_forward.1}
  #allocation0 [shape = 'u32[]', space=smem, size = 0x4, offset = 0x4, fixed_abs, tag = 'smem constant byte address 0x4 - core index']
  #allocation1 [shape = 'u32[144,128]{1,0:T(1,128)}', space=vmem, size = 0x12000, scoped, tag = 'internal scratch']
  #allocation2 [shape = 'f32[1,1]{1,0:T(1,128)S(1)}', space=vmem, size = 0x200, scoped, tag = 'scoped memory for soft_q_forward.1']
  %s0 = inlined_call_operand.vmem [shape: bf16[8,32], index: 0, kind: input, shape index: {}]
  %s1 = inlined_call_operand.hbm [shape: bf16[32,256], index: 1, kind: input, shape index: {}]
  %s2 = inlined_call_operand.vmem [shape: f32[1,256], index: 2, kind: input, shape index: {}]
  %s3 = inlined_call_operand.hbm [shape: bf16[256,256], index: 3, kind: input, shape index: {}]
  %s4 = inlined_call_operand.vmem [shape: f32[1,256], index: 4, kind: input, shape index: {}]
  %s5 = inlined_call_operand.vmem [shape: f32[1,256], index: 5, kind: input, shape index: {}]
  %s6 = inlined_call_operand.<no memory space> [shape: f32[1,1], index: 6, kind: input, shape index: {}]
  %s7 = inlined_call_operand.vmem [shape: f32[1,8], index: 7, kind: output, shape index: {}]
  %s8 = sld [smem:[#allocation0]]
  $region46: #{soft_q_forward.1} parent=0
    _
  %s10 = ssub.s32 1, %s8
  %s11 = scalar_select 0, %s10, %s8
  %v12 = vstv %s6
  %13 = vst [vmem:[#allocation2] sm:$0x1] %v12
  $region1: #{soft_q_forward.1} parent=0
    #allocation3 [shape = 'u8[16384]{0}', space=vmem, size = 0x4000, scoped, tag = 'input window, operand 1, single buffered']
    #allocation4 [shape = 's32[1]{0}', space=sflag, size = 0x4, scoped, tag = 'scoped memory for soft_q_forward.1']
    #allocation5 [shape = 'u8[131072]{0}', space=vmem, size = 0x20000, scoped, tag = 'input window, operand 3, single buffered']
    #allocation6 [shape = 's32[1]{0}', space=sflag, size = 0x4, scoped, tag = 'scoped memory for soft_q_forward.1']
    %14 = vsyncpa [#allocation4], 0
    %15 = vsyncpa [#allocation6], 0
    // Predicated region
    $region2: #{soft_q_forward.1} parent=1 // pred_check
      _
    $region3: #{soft_q_forward.1} parent=1 // pred_check_branch
      %17 = sbr.rel (0) target = $region5
    $region4: #{soft_q_forward.1} parent=1 // pred_region
      _
    $region5: #{soft_q_forward.1} parent=1 // pred_fallthru
      _
    // Predicated region
    $region6: #{soft_q_forward.1} parent=1 // pred_check
      _
    $region7: #{soft_q_forward.1} parent=1 // pred_check_branch
      %19 = sbr.rel (0) target = $region9
    $region8: #{soft_q_forward.1} parent=1 // pred_region
      %s21 = ssub.s32 512, 512
      %22 = vsyncadd [#allocation4], %s21
      %s23 = sshll.u32 [#allocation3], 4
      %s24 = int_to_ptr.vmem [resolvable:$true] %s23
      %29 = dma.hbm_to_vmem [thread:$0]  %s1, 512, %s24, [#allocation4], 128, 128, 8
    $region9: #{soft_q_forward.1} parent=1 // pred_fallthru
      _
    // Predicated region
    $region10: #{soft_q_forward.1} parent=1 // pred_check
      _
    $region11: #{soft_q_forward.1} parent=1 // pred_check_branch
      %31 = sbr.rel (0) target = $region13
    $region12: #{soft_q_forward.1} parent=1 // pred_region
      _
    $region13: #{soft_q_forward.1} parent=1 // pred_fallthru
      _
    // Predicated region
    $region14: #{soft_q_forward.1} parent=1 // pred_check
      _
    $region15: #{soft_q_forward.1} parent=1 // pred_check_branch
      %33 = sbr.rel (0) target = $region17
    $region16: #{soft_q_forward.1} parent=1 // pred_region
      %s35 = ssub.s32 4096, 4096
      %36 = vsyncadd [#allocation6], %s35
      %s37 = sshll.u32 [#allocation5], 4
      %s38 = int_to_ptr.vmem [resolvable:$true] %s37
      %43 = dma.hbm_to_vmem [thread:$0]  %s3, 4096, %s38, [#allocation6], 128, 128, 8
    $region17: #{soft_q_forward.1} parent=1 // pred_fallthru
      _
    // Predicated region
    $region18: #{soft_q_forward.1} parent=1 // pred_check
      _
    $region19: #{soft_q_forward.1} parent=1 // pred_check_branch
      %45 = sbr.rel (0) target = $region21
    $region20: #{soft_q_forward.1} parent=1 // pred_region
      _
    $region21: #{soft_q_forward.1} parent=1 // pred_fallthru
      _
    // Predicated region
    $region22: #{soft_q_forward.1} parent=1 // pred_check
      _
    $region23: #{soft_q_forward.1} parent=1 // pred_check_branch
      %47 = sbr.rel (0) target = $region25
    $region24: #{soft_q_forward.1} parent=1 // pred_region
      _
    $region25: #{soft_q_forward.1} parent=1 // pred_fallthru
      _
    // Predicated region
    $region26: #{soft_q_forward.1} parent=1 // pred_check
      _
    $region27: #{soft_q_forward.1} parent=1 // pred_check_branch
      %49 = sbr.rel (0) target = $region29
    $region28: #{soft_q_forward.1} parent=1 // pred_region
      _
    $region29: #{soft_q_forward.1} parent=1 // pred_fallthru
      _
    // Predicated region
    $region30: #{soft_q_forward.1} parent=1 // pred_check
      _
    $region31: #{soft_q_forward.1} parent=1 // pred_check_branch
      %51 = sbr.rel (0) target = $region33
    $region32: #{soft_q_forward.1} parent=1 // pred_region
      %52 = dma.done [#allocation4], 512
    $region33: #{soft_q_forward.1} parent=1 // pred_fallthru
      _
    // Predicated region
    $region34: #{soft_q_forward.1} parent=1 // pred_check
      _
    $region35: #{soft_q_forward.1} parent=1 // pred_check_branch
      %54 = sbr.rel (0) target = $region37
    $region36: #{soft_q_forward.1} parent=1 // pred_region
      %55 = dma.done [#allocation6], 4096
    $region37: #{soft_q_forward.1} parent=1 // pred_fallthru
      _
    %v57 = vld [vmem:[%s0] sm:$0xf]
    %v58 = vld [vmem:[#allocation3] sm:$0xff]
    %v59 = vld [vmem:[#allocation3 + $0x8] sm:$0xff]
    %v60 = vld [vmem:[#allocation3 + $0x10] sm:$0xff]
    %v61 = vld [vmem:[#allocation3 + $0x18] sm:$0xff]
    %v62 = vld [vmem:[%s2] sm:$0x3]
    %v63 = vld [vmem:[#allocation5] sm:$0xff]
    %v64 = vld [vmem:[#allocation5 + $0x8] sm:$0xff]
    %v65 = vld [vmem:[#allocation5 + $0x10] sm:$0xff]
    %v66 = vld [vmem:[#allocation5 + $0x18] sm:$0xff]
    %v67 = vld [vmem:[#allocation5 + $0x20] sm:$0xff]
    %v68 = vld [vmem:[#allocation5 + $0x28] sm:$0xff]
    %v69 = vld [vmem:[#allocation5 + $0x30] sm:$0xff]
    %v70 = vld [vmem:[#allocation5 + $0x38] sm:$0xff]
    %v71 = vld [vmem:[#allocation5 + $0x40] sm:$0xff]
    %v72 = vld [vmem:[#allocation5 + $0x48] sm:$0xff]
    %v73 = vld [vmem:[#allocation5 + $0x50] sm:$0xff]
    %v74 = vld [vmem:[#allocation5 + $0x58] sm:$0xff]
    %v75 = vld [vmem:[#allocation5 + $0x60] sm:$0xff]
    %v76 = vld [vmem:[#allocation5 + $0x68] sm:$0xff]
    %v77 = vld [vmem:[#allocation5 + $0x70] sm:$0xff]
    %v78 = vld [vmem:[#allocation5 + $0x78] sm:$0xff]
    %v79 = vld [vmem:[#allocation5 + $0x80] sm:$0xff]
    %v80 = vld [vmem:[#allocation5 + $0x88] sm:$0xff]
    %v81 = vld [vmem:[#allocation5 + $0x90] sm:$0xff]
    %v82 = vld [vmem:[#allocation5 + $0x98] sm:$0xff]
    %v83 = vld [vmem:[#allocation5 + $0xa0] sm:$0xff]
    %v84 = vld [vmem:[#allocation5 + $0xa8] sm:$0xff]
    %v85 = vld [vmem:[#allocation5 + $0xb0] sm:$0xff]
    %v86 = vld [vmem:[#allocation5 + $0xb8] sm:$0xff]
    %v87 = vld [vmem:[#allocation5 + $0xc0] sm:$0xff]
    %v88 = vld [vmem:[#allocation5 + $0xc8] sm:$0xff]
    %v89 = vld [vmem:[#allocation5 + $0xd0] sm:$0xff]
    %v90 = vld [vmem:[#allocation5 + $0xd8] sm:$0xff]
    %v91 = vld [vmem:[#allocation5 + $0xe0] sm:$0xff]
    %v92 = vld [vmem:[#allocation5 + $0xe8] sm:$0xff]
    %v93 = vld [vmem:[#allocation5 + $0xf0] sm:$0xff]
    %v94 = vld [vmem:[#allocation5 + $0xf8] sm:$0xff]
    %v95 = vld [vmem:[%s4] sm:$0x3]
    %v96 = vld [vmem:[%s5] sm:$0x3]
    %v97 = vld [vmem:[#allocation2] sm:$0x1]
    %v99 = vlaneseq
    %v100 = vshrl.u32 %v99, 7
    %v101 = vsub.s32 0, %v100
    %v102 = vrot.slane %v62, %v101
    %v103 = vlaneseq
    %v104 = vshrl.u32 %v103, 7
    %v105 = vsub.s32 1, %v104
    %v106 = vrot.slane %v62, %v105
    %v113 = vunpack.c.l.b16 %v58
    %v114 = vunpack.c.h.b16 %v58
    %v115 = vunpack.c.l.b16 %v59
    %v116 = vunpack.c.h.b16 %v59
    %v117 = vunpack.c.l.b16 %v60
    %v118 = vunpack.c.h.b16 %v60
    %v119 = vunpack.c.l.b16 %v61
    %v120 = vunpack.c.h.b16 %v61
    %v121 = vpack.c.b16 %v115, %v113
    %v122 = vpack.c.b16 %v116, %v114
    %v123 = vpack.c.b16 %v119, %v117
    %v124 = vpack.c.b16 %v120, %v118
    %vm129 = vcmask 261120
    %v131 = vsel %vm129, %v57, 0
    %133 = vmatprep.subr.bf16.mxu0 %v122
    %134 = vmatpush1.bf16.msra.mxu0 %v121
    %135 = vmatprep.subr.bf16.mxu0 %v124
    %136 = vmatpush1.bf16.msra.mxu0 %v123
    %137 = vmatprep.subr.bf16.mxu0 0
    %138 = vmatpush1.bf16.msra.mxu0 0
    %139 = vmatprep.subr.bf16.mxu0 0
    %140 = vmatpush1.bf16.msra.mxu0 0
    %141 = vmatprep.subr.bf16.mxu0 0
    %142 = vmatpush1.bf16.msra.mxu0 0
    %143 = vmatprep.subr.bf16.mxu0 0
    %144 = vmatpush1.bf16.msra.mxu0 0
    %145 = vmatprep.subr.bf16.mxu0 0
    %146 = vmatpush1.bf16.msra.mxu0 0
    %147 = vmatprep.subr.bf16.mxu0 0
    %148 = vmatpush1.bf16.msra.mxu0 0
    %149 = vmatprep.subr.bf16.mxu0 0
    %150 = vmatpush1.bf16.msra.mxu0 0
    %151 = vmatprep.subr.bf16.mxu0 0
    %152 = vmatpush1.bf16.msra.mxu0 0
    %153 = vmatprep.subr.bf16.mxu0 0
    %154 = vmatpush1.bf16.msra.mxu0 0
    %155 = vmatprep.subr.bf16.mxu0 0
    %156 = vmatpush1.bf16.msra.mxu0 0
    %157 = vmatprep.subr.bf16.mxu0 0
    %158 = vmatpush1.bf16.msra.mxu0 0
    %159 = vmatprep.subr.bf16.mxu0 0
    %160 = vmatpush1.bf16.msra.mxu0 0
    %161 = vmatprep.subr.bf16.mxu0 0
    %162 = vmatpush1.bf16.msra.mxu0 0
    %163 = vmatprep.subr.bf16.mxu0 0
    %164 = vmatpush1.bf16.msra.mxu0 0
    %165 = vmatprep.mubr.bf16.mxu0 0
    %166 = vmatmul.mubr.bf16.gmra.mrb[0].mxu0 %v131
    %v167 = vpop.f32.mrb[0].mxu0
    %v168 = vadd.f32 %v102, %v167
    %v169 = vpop.f32.mrb[0].mxu0
    %v170 = vadd.f32 %v106, %v169
    %v171 = vpop.f32.mrb[0].mxu0
    %v172 = vpop.f32.mrb[0].mxu0
    %173 = vdwg.mxu0
    %v174 = vmax.f32 %v168, 0.0
    %v175 = vmax.f32 %v170, 0.0
    %v176 = vpack.c.bf16 %v174, %v174
    %v177 = vpack.c.bf16 %v175, %v175
    %v179 = vlaneseq
    %v180 = vshrl.u32 %v179, 7
    %v181 = vsub.s32 0, %v180
    %v182 = vrot.slane %v95, %v181
    %v183 = vlaneseq
    %v184 = vshrl.u32 %v183, 7
    %v185 = vsub.s32 1, %v184
    %v186 = vrot.slane %v95, %v185
    %v221 = vunpack.c.l.b16 %v63
    %v222 = vunpack.c.h.b16 %v63
    %v223 = vunpack.c.l.b16 %v64
    %v224 = vunpack.c.h.b16 %v64
    %v225 = vunpack.c.l.b16 %v65
    %v226 = vunpack.c.h.b16 %v65
    %v227 = vunpack.c.l.b16 %v66
    %v228 = vunpack.c.h.b16 %v66
    %v229 = vunpack.c.l.b16 %v67
    %v230 = vunpack.c.h.b16 %v67
    %v231 = vunpack.c.l.b16 %v68
    %v232 = vunpack.c.h.b16 %v68
    %v233 = vunpack.c.l.b16 %v69
    %v234 = vunpack.c.h.b16 %v69
    %v235 = vunpack.c.l.b16 %v70
    %v236 = vunpack.c.h.b16 %v70
    %v237 = vunpack.c.l.b16 %v71
    %v238 = vunpack.c.h.b16 %v71
    %v239 = vunpack.c.l.b16 %v72
    %v240 = vunpack.c.h.b16 %v72
    %v241 = vunpack.c.l.b16 %v73
    %v242 = vunpack.c.h.b16 %v73
    %v243 = vunpack.c.l.b16 %v74
    %v244 = vunpack.c.h.b16 %v74
    %v245 = vunpack.c.l.b16 %v75
    %v246 = vunpack.c.h.b16 %v75
    %v247 = vunpack.c.l.b16 %v76
    %v248 = vunpack.c.h.b16 %v76
    %v249 = vunpack.c.l.b16 %v77
    %v250 = vunpack.c.h.b16 %v77
    %v251 = vunpack.c.l.b16 %v78
    %v252 = vunpack.c.h.b16 %v78
    %v253 = vunpack.c.l.b16 %v79
    %v254 = vunpack.c.h.b16 %v79
    %v255 = vunpack.c.l.b16 %v80
    %v256 = vunpack.c.h.b16 %v80
    %v257 = vunpack.c.l.b16 %v81
    %v258 = vunpack.c.h.b16 %v81
    %v259 = vunpack.c.l.b16 %v82
    %v260 = vunpack.c.h.b16 %v82
    %v261 = vunpack.c.l.b16 %v83
    %v262 = vunpack.c.h.b16 %v83
    %v263 = vunpack.c.l.b16 %v84
    %v264 = vunpack.c.h.b16 %v84
    %v265 = vunpack.c.l.b16 %v85
    %v266 = vunpack.c.h.b16 %v85
    %v267 = vunpack.c.l.b16 %v86
    %v268 = vunpack.c.h.b16 %v86
    %v269 = vunpack.c.l.b16 %v87
    %v270 = vunpack.c.h.b16 %v87
    %v271 = vunpack.c.l.b16 %v88
    %v272 = vunpack.c.h.b16 %v88
    %v273 = vunpack.c.l.b16 %v89
    %v274 = vunpack.c.h.b16 %v89
    %v275 = vunpack.c.l.b16 %v90
    %v276 = vunpack.c.h.b16 %v90
    %v277 = vunpack.c.l.b16 %v91
    %v278 = vunpack.c.h.b16 %v91
    %v279 = vunpack.c.l.b16 %v92
    %v280 = vunpack.c.h.b16 %v92
    %v281 = vunpack.c.l.b16 %v93
    %v282 = vunpack.c.h.b16 %v93
    %v283 = vunpack.c.l.b16 %v94
    %v284 = vunpack.c.h.b16 %v94
    %v285 = vpack.c.b16 %v223, %v221
    %v286 = vpack.c.b16 %v224, %v222
    %v287 = vpack.c.b16 %v227, %v225
    %v288 = vpack.c.b16 %v228, %v226
    %v289 = vpack.c.b16 %v231, %v229
    %v290 = vpack.c.b16 %v232, %v230
    %v291 = vpack.c.b16 %v235, %v233
    %v292 = vpack.c.b16 %v236, %v234
    %v293 = vpack.c.b16 %v239, %v237
    %v294 = vpack.c.b16 %v240, %v238
    %v295 = vpack.c.b16 %v243, %v241
    %v296 = vpack.c.b16 %v244, %v242
    %v297 = vpack.c.b16 %v247, %v245
    %v298 = vpack.c.b16 %v248, %v246
    %v299 = vpack.c.b16 %v251, %v249
    %v300 = vpack.c.b16 %v252, %v250
    %v301 = vpack.c.b16 %v255, %v253
    %v302 = vpack.c.b16 %v256, %v254
    %v303 = vpack.c.b16 %v259, %v257
    %v304 = vpack.c.b16 %v260, %v258
    %v305 = vpack.c.b16 %v263, %v261
    %v306 = vpack.c.b16 %v264, %v262
    %v307 = vpack.c.b16 %v267, %v265
    %v308 = vpack.c.b16 %v268, %v266
    %v309 = vpack.c.b16 %v271, %v269
    %v310 = vpack.c.b16 %v272, %v270
    %v311 = vpack.c.b16 %v275, %v273
    %v312 = vpack.c.b16 %v276, %v274
    %v313 = vpack.c.b16 %v279, %v277
    %v314 = vpack.c.b16 %v280, %v278
    %v315 = vpack.c.b16 %v283, %v281
    %v316 = vpack.c.b16 %v284, %v282
    %349 = vmatprep.subr.bf16.mxu0 %v286
    %350 = vmatpush1.bf16.msra.mxu0 %v285
    %351 = vmatprep.subr.bf16.mxu0 %v288
    %352 = vmatpush1.bf16.msra.mxu0 %v287
    %353 = vmatprep.subr.bf16.mxu0 %v290
    %354 = vmatpush1.bf16.msra.mxu0 %v289
    %355 = vmatprep.subr.bf16.mxu0 %v292
    %356 = vmatpush1.bf16.msra.mxu0 %v291
    %357 = vmatprep.subr.bf16.mxu0 %v294
    %358 = vmatpush1.bf16.msra.mxu0 %v293
    %359 = vmatprep.subr.bf16.mxu0 %v296
    %360 = vmatpush1.bf16.msra.mxu0 %v295
    %361 = vmatprep.subr.bf16.mxu0 %v298
    %362 = vmatpush1.bf16.msra.mxu0 %v297
    %363 = vmatprep.subr.bf16.mxu0 %v300
    %364 = vmatpush1.bf16.msra.mxu0 %v299
    %365 = vmatprep.subr.bf16.mxu0 %v302
    %366 = vmatpush1.bf16.msra.mxu0 %v301
    %367 = vmatprep.subr.bf16.mxu0 %v304
    %368 = vmatpush1.bf16.msra.mxu0 %v303
    %369 = vmatprep.subr.bf16.mxu0 %v306
    %370 = vmatpush1.bf16.msra.mxu0 %v305
    %371 = vmatprep.subr.bf16.mxu0 %v308
    %372 = vmatpush1.bf16.msra.mxu0 %v307
    %373 = vmatprep.subr.bf16.mxu0 %v310
    %374 = vmatpush1.bf16.msra.mxu0 %v309
    %375 = vmatprep.subr.bf16.mxu0 %v312
    %376 = vmatpush1.bf16.msra.mxu0 %v311
    %377 = vmatprep.subr.bf16.mxu0 %v314
    %378 = vmatpush1.bf16.msra.mxu0 %v313
    %379 = vmatprep.subr.bf16.mxu0 %v316
    %380 = vmatpush1.bf16.msra.mxu0 %v315
    %381 = vmatprep.mubr.bf16.mxu0 %v177
    %382 = vmatmul.mubr.bf16.gmra.mrb[0].mxu0 %v176
    %v383 = vpop.f32.mrb[0].mxu0
    %v384 = vadd.f32 %v182, %v383
    %v385 = vpop.f32.mrb[0].mxu0
    %v386 = vadd.f32 %v186, %v385
    %v387 = vpop.f32.mrb[0].mxu0
    %v388 = vpop.f32.mrb[0].mxu0
    %389 = vdwg.mxu0
    %v390 = vmax.f32 %v384, 0.0
    %v391 = vmax.f32 %v386, 0.0
    %393 = vset.pattern.permute.xlu0 0
    %394 = vperm.xlu0 %393, %v97
    %v395 = vpop.permute.xlu0 %394
    %v397 = vlaneseq
    %v398 = vshrl.u32 %v397, 7
    %v399 = vsub.s32 0, %v398
    %v400 = vrot.slane %v395, %v399
    %v402 = vlaneseq
    %v403 = vshrl.u32 %v402, 7
    %v404 = vsub.s32 0, %v403
    %v405 = vrot.slane %v96, %v404
    %v406 = vlaneseq
    %v407 = vshrl.u32 %v406, 7
    %v408 = vsub.s32 1, %v407
    %v409 = vrot.slane %v96, %v408
    %412 = vmatprep.subr.mxu0 %v391
    %413 = vmatpush1.xpose.msra.mxu0 %v390
    %414 = vmatprep.subr.mxu0 0.0
    %415 = vmatpush1.xpose.msra.mxu0 0.0
    %416 = vmatprep.subr.mxu0 0.0
    %417 = vmatpush1.xpose.msra.mxu0 0.0
    %418 = vmatprep.subr.mxu0 0.0
    %419 = vmatpush1.xpose.msra.mxu0 0.0
    %420 = vmatprep.subr.mxu0 0.0
    %421 = vmatpush1.xpose.msra.mxu0 0.0
    %422 = vmatprep.subr.mxu0 0.0
    %423 = vmatpush1.xpose.msra.mxu0 0.0
    %424 = vmatprep.subr.mxu0 0.0
    %425 = vmatpush1.xpose.msra.mxu0 0.0
    %426 = vmatprep.subr.mxu0 0.0
    %427 = vmatpush1.xpose.msra.mxu0 0.0
    %428 = vmatprep.subr.mxu0 0.0
    %429 = vmatpush1.xpose.msra.mxu0 0.0
    %430 = vmatprep.subr.mxu0 0.0
    %431 = vmatpush1.xpose.msra.mxu0 0.0
    %432 = vmatprep.subr.mxu0 0.0
    %433 = vmatpush1.xpose.msra.mxu0 0.0
    %434 = vmatprep.subr.mxu0 0.0
    %435 = vmatpush1.xpose.msra.mxu0 0.0
    %436 = vmatprep.subr.mxu0 0.0
    %437 = vmatpush1.xpose.msra.mxu0 0.0
    %438 = vmatprep.subr.mxu0 0.0
    %439 = vmatpush1.xpose.msra.mxu0 0.0
    %440 = vmatprep.subr.mxu0 0.0
    %441 = vmatpush1.xpose.msra.mxu0 0.0
    %442 = vmatprep.subr.mxu0 0.0
    %443 = vmatpush1.xpose.msra.mxu0 0.0
    %444 = vmatprep.subr.mxu0 0.0
    %445 = vmatpush1.xpose.msra.mxu0 0.0
    %446 = vmatprep.subr.mxu0 0.0
    %447 = vmatpush1.xpose.msra.mxu0 0.0
    %448 = vmatprep.subr.mxu0 0.0
    %449 = vmatpush1.xpose.msra.mxu0 0.0
    %450 = vmatprep.subr.mxu0 0.0
    %451 = vmatpush1.xpose.msra.mxu0 0.0
    %452 = vmatprep.subr.mxu0 0.0
    %453 = vmatpush1.xpose.msra.mxu0 0.0
    %454 = vmatprep.subr.mxu0 0.0
    %455 = vmatpush1.xpose.msra.mxu0 0.0
    %456 = vmatprep.subr.mxu0 0.0
    %457 = vmatpush1.xpose.msra.mxu0 0.0
    %458 = vmatprep.subr.mxu0 0.0
    %459 = vmatpush1.xpose.msra.mxu0 0.0
    %460 = vmatprep.subr.mxu0 0.0
    %461 = vmatpush1.xpose.msra.mxu0 0.0
    %462 = vmatprep.subr.mxu0 0.0
    %463 = vmatpush1.xpose.msra.mxu0 0.0
    %464 = vmatprep.subr.mxu0 0.0
    %465 = vmatpush1.xpose.msra.mxu0 0.0
    %466 = vmatprep.subr.mxu0 0.0
    %467 = vmatpush1.xpose.msra.mxu0 0.0
    %468 = vmatprep.subr.mxu0 0.0
    %469 = vmatpush1.xpose.msra.mxu0 0.0
    %470 = vmatprep.subr.mxu0 0.0
    %471 = vmatpush1.xpose.msra.mxu0 0.0
    %472 = vmatprep.subr.mxu0 0.0
    %473 = vmatpush1.xpose.msra.mxu0 0.0
    %474 = vmatprep.subr.mxu0 0.0
    %475 = vmatpush1.xpose.msra.mxu0 0.0
    %476 = vmatprep.mubr.f32.mxu0 %v409
    %477 = vmatmul.mubr.f32.gmra.mrb[0].mxu0 %v405
    %v478 = vpop.f32.mrb[0].mxu0
    %v479 = vadd.f32 %v400, %v478
    %v480 = vpop.f32.mrb[0].mxu0
    %481 = vdwg.mxu0
    %vm482 = vcmask 57344
    %483 = vst.msk [vmem:[%s7] sm:$0x1] %vm482, %v479
    // Predicated region
    $region38: #{soft_q_forward.1} parent=1 // pred_check
      _
    $region39: #{soft_q_forward.1} parent=1 // pred_check_branch
      %485 = sbr.rel (0) target = $region41
    $region40: #{soft_q_forward.1} parent=1 // pred_region
      _
    $region41: #{soft_q_forward.1} parent=1 // pred_fallthru
      _
    // Predicated region
    $region42: #{soft_q_forward.1} parent=1 // pred_check
      _
    $region43: #{soft_q_forward.1} parent=1 // pred_check_branch
      %487 = sbr.rel (0) target = $region45
    $region44: #{soft_q_forward.1} parent=1 // pred_region
      _
    $region45: #{soft_q_forward.1} parent=1 // pred_fallthru
      _
    %488 = vsyncpa [#allocation4], 1
    %489 = vsyncpa [#allocation6], 1

</llo_original>
